<compile_context>
chip_gen: v7x
topology: tpu7x:2x2x1
jax: 0.10.0
libtpu: 0.0.40
codegen_flags: <defaults>
</compile_context>

<pallas_src>
import functools

import jax
import jax.numpy as jnp
from jax.experimental import pallas as pl
from jax.experimental.pallas import tpu as pltpu
from jax.scipy.special import logsumexp


def _round_up(x, m):
    return (x + m - 1) // m * m


def _choose_row_tiling(n, row_tile):
    """Pick (tm, n_pad, num_tiles) for the row (B*T) axis.

    Preference order: >=2 tiles (keep both v7x TensorCores busy), no padded
    rows (avoids an extra HBM slice copy of the logits), even tile count
    (balanced 2-core split), largest tile (amortize ~0.35us per-grid-step
    overhead).
    """
    n8 = _round_up(max(n, 1), 8)
    rt = max(8, (row_tile // 8) * 8)
    start = min(rt, n8)
    cands = []
    for tm in range(start, 0, -8):
        nt = (n8 + tm - 1) // tm
        cands.append((tm, nt * tm, nt))

    def score(c):
        tm, n_pad, nt = c
        return (
            nt >= 2,                  # use both v7x TensorCores
            n_pad == n,               # no padded rows -> no post-kernel slice
            nt % 2 == 0 or nt == 1,   # balanced split across 2 cores
            tm,                       # biggest tile: fewest grid steps
        )

    return max(cands, key=score)


def _gather_rows(idx_col, table, tm, vp):
    """Embedding row gather via one-hot matmul on the MXU.

    One-hot values are exactly 0/1 and the matmul is pinned to HIGHEST
    precision, so the selected f32 table rows are copied exactly.
    Returns (vocab_iota, select_mask, logits).
    """
    vocab_iota = jax.lax.broadcasted_iota(jnp.int32, (tm, vp), 1)
    sel = vocab_iota == idx_col
    onehot = sel.astype(jnp.float32)
    logits = jnp.dot(onehot, table,
                     preferred_element_type=jnp.float32,
                     precision=jax.lax.Precision.HIGHEST)
    return vocab_iota, sel, logits


def _bigram_loss_kernel(idx_ref, tgt_ref, table_ref, lse_ref,
                        logits_ref, loss_ref, *, n_rows, tm, vp):
    """One row tile: gather logits, store them, emit a partial CE sum.

    The per-row logsumexp is NOT recomputed here: it is gathered from the
    precomputed per-vocab LSE row (lse_ref), since every logits row is a
    table row.  No exp/max left in the hot loop.
    """
    i = pl.program_id(0)
    vocab_iota, sel, logits = _gather_rows(idx_ref[...], table_ref[...], tm, vp)
    logits_ref[...] = logits.astype(logits_ref.dtype)

    # Gather lse[idx] and logits[row, tgt] with select + lane reductions.
    lse = jnp.sum(jnp.where(sel, lse_ref[...], 0.0),
                  axis=-1, keepdims=True)                         # (tm, 1)
    tgt_logit = jnp.sum(jnp.where(vocab_iota == tgt_ref[...], logits, 0.0),
                        axis=-1, keepdims=True)                   # (tm, 1)

    # Mask rows that are padding (global row index >= n_rows).
    row_iota = jax.lax.broadcasted_iota(jnp.int32, (tm, 1), 0)
    valid = (i * tm + row_iota) < n_rows
    per_row = jnp.where(valid, lse - tgt_logit, 0.0)

    partial = jnp.sum(per_row, axis=0, keepdims=True)             # (1, 1)
    loss_ref[...] = partial.reshape(1, 1, 1)


def _bigram_logits_kernel(idx_ref, table_ref, logits_ref, *, tm, vp):
    """Inference path: gather logits only, no cross-entropy work."""
    _, _, logits = _gather_rows(idx_ref[...], table_ref[...], tm, vp)
    logits_ref[...] = logits.astype(logits_ref.dtype)


def _pad_rows_col(x_flat, n, n_pad):
    col = x_flat.reshape(n, 1)
    if n_pad == n:
        return col
    return jnp.zeros((n_pad, 1), x_flat.dtype).at[:n, :].set(col)


def bigram_forward(idx, table, targets=None, *, row_tile=1024,
                   logits_dtype=jnp.float32):
    """Mirrors BigramLanguageModel.forward: returns (logits, loss)."""
    B, T = idx.shape
    V = table.shape[0]
    N = B * T

    vp = _round_up(V, 128)                      # lane-dense vocab (x128 only)

    # Keep the double-buffered (tm, vp) logits block under ~8 MiB of VMEM.
    rt_cap = max(8, (8 << 20) // (2 * vp * 4))
    tm, n_pad, num_tiles = _choose_row_tiling(N, min(row_tile, rt_cap))

    # Zero-pad the table to (vp, vp).  Padded columns leak zeros into the
    # padded logits region (sliced off below); padded rows are never selected
    # (idx < V; padded idx rows use 0).  No -1e30 sentinels needed since the
    # logsumexp is precomputed from the unpadded table.
    table_f32 = table.astype(jnp.float32)
    if vp != V:
        table_p = jnp.zeros((vp, vp), jnp.float32).at[:V, :V].set(table_f32)
    else:
        table_p = table_f32

    idx_col = _pad_rows_col(idx.reshape(N).astype(jnp.int32), N, n_pad)

    with_loss = targets is not None
    if with_loss:
        tgt_col = _pad_rows_col(targets.reshape(N).astype(jnp.int32), N, n_pad)
        # Hoisted per-vocab logsumexp: one row of vp values, reused by every
        # token instead of recomputing max/exp/sum over (tm, vp) per tile.
        lse_v = logsumexp(table_f32, axis=-1)                    # (V,)
        lse_row = jnp.zeros((1, vp), jnp.float32).at[0, :V].set(lse_v)

    out_bytes = jnp.dtype(logits_dtype).itemsize
    # VMEM actually needed (pipeline double-buffers every input/output block).
    vmem_needed = (2 * tm * vp * out_bytes      # logits block (double-buffered)
                   + 2 * vp * vp * 4            # table block (double-buffered)
                   + 2 * vp * 4                 # lse row
                   + 8 * tm * 4)                # idx / tgt columns
    # 2x headroom, floor 16 MiB, cap 48 MiB (leave slack on v7x's 64 MiB/TC).
    vmem_limit = int(min(48 << 20, max(2 * vmem_needed, 16 << 20)))

    grid = (num_tiles,)
    idx_spec = pl.BlockSpec((tm, 1), lambda i: (i, 0))
    table_spec = pl.BlockSpec((vp, vp), lambda i: (0, 0))    # constant block
    logits_spec = pl.BlockSpec((tm, vp), lambda i: (i, 0))   # lane-dense out
    compiler_params = pltpu.CompilerParams(
        # Row tiles are fully independent (per-tile partial losses), so the
        # axis is "parallel" and shards across both TensorCores on v7x.
        dimension_semantics=("parallel",),
        vmem_limit_bytes=vmem_limit,
    )

    if with_loss:
        kernel = functools.partial(_bigram_loss_kernel, n_rows=N, tm=tm, vp=vp)
        cost = pl.CostEstimate(
            flops=2 * n_pad * vp * vp + 4 * n_pad * vp,
            transcendentals=0,
            bytes_accessed=(out_bytes * n_pad * vp
                            + 4 * (vp * vp + vp + 2 * n_pad + num_tiles)))
        logits_pad, loss_parts = pl.pallas_call(
            kernel,
            out_shape=(
                jax.ShapeDtypeStruct((n_pad, vp), logits_dtype),
                jax.ShapeDtypeStruct((num_tiles, 1, 1), jnp.float32),
            ),
            grid=grid,
            in_specs=[idx_spec,
                      pl.BlockSpec((tm, 1), lambda i: (i, 0)),
                      table_spec,
                      pl.BlockSpec((1, vp), lambda i: (0, 0))],
            out_specs=(logits_spec,
                       pl.BlockSpec((1, 1, 1), lambda i: (i, 0, 0))),
            compiler_params=compiler_params,
            cost_estimate=cost,
        )(idx_col, tgt_col, table_p, lse_row)
        loss = jnp.sum(loss_parts) / N          # mean over the N real rows
    else:
        kernel = functools.partial(_bigram_logits_kernel, tm=tm, vp=vp)
        cost = pl.CostEstimate(
            flops=2 * n_pad * vp * vp,
            transcendentals=0,
            bytes_accessed=(out_bytes * n_pad * vp + 4 * (vp * vp + n_pad)))
        logits_pad = pl.pallas_call(
            kernel,
            out_shape=jax.ShapeDtypeStruct((n_pad, vp), logits_dtype),
            grid=grid,
            in_specs=[idx_spec, table_spec],
            out_specs=logits_spec,
            compiler_params=compiler_params,
            cost_estimate=cost,
        )(idx_col, table_p)
        loss = None

    # Only pay for a slice copy when padding was actually introduced.
    if n_pad == N and vp == V:
        logits = logits_pad.reshape(B, T, V)
    else:
        logits = logits_pad[:N, :V].reshape(B, T, V)
    return logits, loss


def _reference_forward(idx, table, targets):
    """Pure-JAX reference for correctness check."""
    logits = table[idx]                                   # (B, T, V)
    B, T, V = logits.shape
    lf = logits.reshape(B * T, V)
    tf = targets.reshape(B * T)
    lse = logsumexp(lf, axis=-1)
    loss = jnp.mean(lse - lf[jnp.arange(B * T), tf])
    return logits, loss


if __name__ == "__main__":
    def check(B, T, V):
        key = jax.random.PRNGKey(0)
        k_tab, k_idx, k_tgt = jax.random.split(key, 3)

        # nn.Embedding default init: N(0, 1).
        table = jax.random.normal(k_tab, (V, V), dtype=jnp.float32)
        idx = jax.random.randint(k_idx, (B, T), 0, V, dtype=jnp.int32)
        targets = jax.random.randint(k_tgt, (B, T), 0, V, dtype=jnp.int32)

        logits, loss = bigram_forward(idx, table, targets)
        jax.block_until_ready((logits, loss))
        ref_logits, ref_loss = _reference_forward(idx, table, targets)
        assert logits.shape == (B, T, V)
        assert jnp.allclose(logits, ref_logits, atol=1e-5), "logits mismatch"
        assert jnp.allclose(loss, ref_loss, atol=1e-5), "loss mismatch"

        # targets=None path (loss is None, CE block compiled out).
        logits_only, loss_none = bigram_forward(idx, table, None)
        jax.block_until_ready(logits_only)
        assert loss_none is None
        assert jnp.allclose(logits_only, ref_logits, atol=1e-5), "infer mismatch"

    check(2, 8, 128)   # lane-aligned vocab; N=16 -> tm=8, 2 even tiles, no pad
    check(3, 5, 65)    # ragged: N=15 (row masking) and V=65 (lane padding)
    print("KERNEL_OK")
</pallas_src>

<mosaic_0001>
module attributes {stable_mosaic.version = 11 : i64} {
  func.func @_bigram_loss_kernel(%arg0: i32, %arg1: memref<8x1xi32, #tpu.memory_space<vmem>>, %arg2: memref<8x1xi32, #tpu.memory_space<vmem>>, %arg3: memref<128x128xf32, #tpu.memory_space<vmem>>, %arg4: memref<1x128xf32, #tpu.memory_space<vmem>>, %arg5: memref<8x128xf32, #tpu.memory_space<vmem>>, %arg6: memref<1x1x1xf32, #tpu.memory_space<vmem>>) attributes {dimension_semantics = [#tpu.dimension_semantics<parallel>], iteration_bounds = array<i64: 2>, scalar_prefetch = 0 : i64, scratch_operands = 0 : i64, tpu.core_type = #tpu.core_type<tc>, window_params = [{transform_indices = @transform_0, window_bounds = array<i64: 8, 1>}, {transform_indices = @transform_1, window_bounds = array<i64: 8, 1>}, {pipeline_mode = #tpu.pipeline_mode<synchronous>, transform_indices = @transform_2, window_bounds = array<i64: 128, 128>}, {pipeline_mode = #tpu.pipeline_mode<synchronous>, transform_indices = @transform_3, window_bounds = array<i64: 1, 128>}, {transform_indices = @transform_4, window_bounds = array<i64: 8, 128>}, {transform_indices = @transform_5, window_bounds = array<i64: 1, 1, 1>}]} {
    %c0 = arith.constant 0 : index
    %c0_0 = arith.constant 0 : index
    %0 = vector.load %arg1[%c0, %c0_0] : memref<8x1xi32, #tpu.memory_space<vmem>>, vector<8x1xi32>
    %c0_1 = arith.constant 0 : index
    %c0_2 = arith.constant 0 : index
    %1 = vector.load %arg3[%c0_1, %c0_2] : memref<128x128xf32, #tpu.memory_space<vmem>>, vector<128x128xf32>
    %2 = tpu.iota {dimensions = array<i32: 1>} : vector<8x128xi32>
    %3 = vector.broadcast %0 : vector<8x1xi32> to vector<8x128xi32>
    %4 = arith.cmpi eq, %2, %3 : vector<8x128xi32>
    %5 = arith.extui %4 : vector<8x128xi1> to vector<8x128xi32>
    %6 = arith.sitofp %5 : vector<8x128xi32> to vector<8x128xf32>
    %cst = arith.constant dense<0.000000e+00> : vector<8x128xf32>
    %7 = tpu.matmul %6, %1, %cst {dimension_numbers = #tpu.dot_dimension_numbers<[1], [0], [0], [1], [0, 0, 1, 1], [], []>, precision = #tpu.contract_precision<fp32>} : vector<8x128xf32>, vector<128x128xf32>, vector<8x128xf32> -> vector<8x128xf32>
    %c0_3 = arith.constant 0 : index
    %c0_4 = arith.constant 0 : index
    %8 = vector.load %arg5[%c0_3, %c0_4] : memref<8x128xf32, #tpu.memory_space<vmem>>, vector<8x128xf32>
    tpu.vector_store %arg5[%c0_3, %c0_4], %7 {strides = array<i32>} : memref<8x128xf32, #tpu.memory_space<vmem>>, vector<8x128xf32>,
    %c0_5 = arith.constant 0 : index
    %c0_6 = arith.constant 0 : index
    %9 = vector.load %arg4[%c0_5, %c0_6] : memref<1x128xf32, #tpu.memory_space<vmem>>, vector<1x128xf32>
    %cst_7 = arith.constant 0.000000e+00 : f32
    %10 = vector.shape_cast %9 : vector<1x128xf32> to vector<1x128xf32>
    %11 = vector.broadcast %10 : vector<1x128xf32> to vector<8x128xf32>
    %12 = vector.broadcast %cst_7 : f32 to vector<8x128xf32>
    %13 = arith.select %4, %11, %12 : vector<8x128xi1>, vector<8x128xf32>
    %cst_8 = arith.constant dense<0.000000e+00> : vector<8xf32>
    %14 = vector.multi_reduction <add>, %13, %cst_8 [1] : vector<8x128xf32> to vector<8xf32>
    %15 = vector.shape_cast %14 : vector<8xf32> to vector<8x1xf32>
    %c0_9 = arith.constant 0 : index
    %c0_10 = arith.constant 0 : index
    %16 = vector.load %arg2[%c0_9, %c0_10] : memref<8x1xi32, #tpu.memory_space<vmem>>, vector<8x1xi32>
    %17 = vector.broadcast %16 : vector<8x1xi32> to vector<8x128xi32>
    %18 = arith.cmpi eq, %2, %17 : vector<8x128xi32>
    %cst_11 = arith.constant 0.000000e+00 : f32
    %19 = vector.broadcast %cst_11 : f32 to vector<8x128xf32>
    %20 = arith.select %18, %7, %19 : vector<8x128xi1>, vector<8x128xf32>
    %cst_12 = arith.constant dense<0.000000e+00> : vector<8xf32>
    %21 = vector.multi_reduction <add>, %20, %cst_12 [1] : vector<8x128xf32> to vector<8xf32>
    %22 = vector.shape_cast %21 : vector<8xf32> to vector<8x1xf32>
    %23 = tpu.iota {dimensions = array<i32: 0>} : vector<8x1xi32>
    %c8_i32 = arith.constant 8 : i32
    %24 = arith.muli %arg0, %c8_i32 : i32
    %25 = vector.broadcast %24 : i32 to vector<8x1xi32>
    %26 = arith.addi %25, %23 : vector<8x1xi32>
    %c16_i32 = arith.constant 16 : i32
    %27 = vector.broadcast %c16_i32 : i32 to vector<8x1xi32>
    %28 = arith.cmpi slt, %26, %27 : vector<8x1xi32>
    %29 = arith.subf %15, %22 : vector<8x1xf32>
    %cst_13 = arith.constant 0.000000e+00 : f32
    %30 = vector.broadcast %cst_13 : f32 to vector<8x1xf32>
    %31 = arith.select %28, %29, %30 : vector<8x1xi1>, vector<8x1xf32>
    %cst_14 = arith.constant dense<0.000000e+00> : vector<1xf32>
    %32 = vector.multi_reduction <add>, %31, %cst_14 [0] : vector<8x1xf32> to vector<1xf32>
    %33 = vector.shape_cast %32 : vector<1xf32> to vector<1x1xf32>
    %34 = vector.shape_cast %33 : vector<1x1xf32> to vector<1x1x1xf32>
    %c0_15 = arith.constant 0 : index
    %c0_16 = arith.constant 0 : index
    %c0_17 = arith.constant 0 : index
    %35 = vector.load %arg6[%c0_15, %c0_16, %c0_17] : memref<1x1x1xf32, #tpu.memory_space<vmem>>, vector<1x1x1xf32>
    tpu.vector_store %arg6[%c0_15, %c0_16, %c0_17], %34 {strides = array<i32>} : memref<1x1x1xf32, #tpu.memory_space<vmem>>, vector<1x1x1xf32>,
    return
  }
  func.func @transform_0(%arg0: i32) -> (i32, i32) {
    %c0_i32 = arith.constant 0 : i32
    %c0_i32_0 = arith.constant 0 : i32
    return %arg0, %c0_i32 : i32, i32
  }
  func.func @transform_1(%arg0: i32) -> (i32, i32) {
    %c0_i32 = arith.constant 0 : i32
    %c0_i32_0 = arith.constant 0 : i32
    return %arg0, %c0_i32 : i32, i32
  }
  func.func @transform_2(%arg0: i32) -> (i32, i32) {
    %c0_i32 = arith.constant 0 : i32
    %c0_i32_0 = arith.constant 0 : i32
    %c0_i32_1 = arith.constant 0 : i32
    return %c0_i32, %c0_i32_0 : i32, i32
  }
  func.func @transform_3(%arg0: i32) -> (i32, i32) {
    %c0_i32 = arith.constant 0 : i32
    %c0_i32_0 = arith.constant 0 : i32
    %c0_i32_1 = arith.constant 0 : i32
    return %c0_i32, %c0_i32_0 : i32, i32
  }
  func.func @transform_4(%arg0: i32) -> (i32, i32) {
    %c0_i32 = arith.constant 0 : i32
    %c0_i32_0 = arith.constant 0 : i32
    return %arg0, %c0_i32 : i32, i32
  }
  func.func @transform_5(%arg0: i32) -> (i32, i32, i32) {
    %c0_i32 = arith.constant 0 : i32
    %c0_i32_0 = arith.constant 0 : i32
    %c0_i32_1 = arith.constant 0 : i32
    return %arg0, %c0_i32, %c0_i32_0 : i32, i32, i32
  }
}

</mosaic_0001>

<llo_original>
// kernel: tpu_custom_call.1
$region0: #{tpu_custom_call.1}
  #allocation0 [shape = 'u32[]', space=smem, size = 0x4, offset = 0x4, fixed_abs, tag = 'smem constant byte address 0x4 - core index']
  #allocation1 [shape = 'u32[144,128]{1,0:T(1,128)}', space=vmem, size = 0x12000, scoped, tag = 'internal scratch']
  %s0 = inlined_call_operand.vmem [shape: s32[16,1], index: 0, kind: input, shape index: {}]
  %s1 = inlined_call_operand.vmem [shape: s32[16,1], index: 1, kind: input, shape index: {}]
  %s2 = inlined_call_operand.hbm [shape: f32[128,128], index: 2, kind: input, shape index: {}]
  %s3 = inlined_call_operand.vmem [shape: f32[1,128], index: 3, kind: input, shape index: {}]
  %s4 = inlined_call_operand.hbm [shape: f32[16,128], index: 4, kind: output, shape index: {0}]
  %s5 = inlined_call_operand.vmem [shape: f32[2,1,1], index: 5, kind: output, shape index: {1}]
  %6 = xla_tuple %s4, %s5
  %s7 = sld [smem:[#allocation0]]
  $region61: #{tpu_custom_call.1} parent=0
    _
  %s9 = ssub.s32 1, %s7
  %s10 = scalar_select 0, %s9, %s7
  $region1: #{tpu_custom_call.1} parent=0
    #allocation2 [shape = 'u8[65536]{0}', space=vmem, size = 0x10000, scoped, tag = 'input window, operand 2, single buffered']
    #allocation3 [shape = 's32[2]{0}', space=sflag, size = 0x8, scoped, tag = 'scoped memory for tpu_custom_call.1']
    #allocation4 [shape = 's32[2]{0}', space=sflag, size = 0x8, scoped, tag = 'scoped memory for tpu_custom_call.1']
    #allocation5 [shape = 'u8[8192]{0}', space=vmem, size = 0x2000, scoped, tag = 'output window, operand 0']
    %11 = vsyncpa [#allocation3], 0
    %12 = vsyncpa [#allocation4], 0
    %s13 = scalar_lea.sflag [#allocation4], 1
    %14 = vsyncpa %s13, 0
    loop: start=0, step=1, limit=4
    $region2: #{tpu_custom_call.1} parent=1 // loop_pre_header
      _
    $region3: #{tpu_custom_call.1} parent=1 // loop_header
      %s16 = sphi 0, %s20
      %p17 = scmp.ge.s32.totalorder %s16, 4
      %s26 = sphi 0, %s28
      %s29 = sphi 0, %s26
      %s30 = sphi 0, %s29
      %s46 = sphi 0, %s30
      %s52 = sphi 0, %s54
      %s55 = sphi 0, %s52
      %s56 = sphi 0, %s55
      %s72 = sphi 0, %s56
      %s76 = sphi 0, %s76
      %s78 = sphi 0, %s76
      %s79 = sphi 0, %s78
      %s93 = sphi 0, %s79
      %s97 = sphi 0, %s97
      %s99 = sphi 0, %s97
      %s100 = sphi 0, %s99
      %s114 = sphi 0, %s100
      %s120 = sphi 0, %s122
      %s123 = sphi 0, %s120
      %s124 = sphi 0, %s123
      %s140 = sphi 0, %s124
      %s146 = sphi 0, %s148
      %s149 = sphi 0, %s146
      %s150 = sphi 0, %s149
      %s166 = sphi 0, %s150
    $region4: #{tpu_custom_call.1} parent=1 // loop_header_branch
      %19 = sbr.rel (%p17) target = $region8
    $region5: #{tpu_custom_call.1} parent=1 // loop_body
      %s21 = ssub.s32 %s16, 1
      %s22 = ssub.s32 %s16, 2
      %s23 = sadd.s32 %s16, 1
      %s24 = ssub.s32 %s16, %s23
      %p25 = scmp.eq.s32.totalorder %s24, 0
      %s27 = sadd.s32 %s26, 1
      %s28 = scalar_select %p25, %s26, %s27
      %p31 = pneg %p25
      %p32 = scmp.eq.s32.totalorder %s16, 1
      %p33 = por %p31, %p32
      %p34 = scmp.ne.s32.totalorder %s26, %s29
      %p35 = scmp.eq.s32.totalorder %s16, 0
      %p36 = por %p34, %p35
      %p37 = scmp.ne.s32.totalorder %s26, %s29
      %p38 = scmp.eq.s32.totalorder %s21, 1
      %p39 = por %p37, %p38
      %p40 = scmp.ne.s32.totalorder %s29, %s30
      %p41 = scmp.eq.s32.totalorder %s21, 0
      %p42 = por %p40, %p41
      %p43 = scmp.ne.s32.totalorder %s29, %s30
      %p44 = scmp.eq.s32.totalorder %s22, 1
      %p45 = por %p43, %p44
      %p47 = scmp.ne.s32.totalorder %s30, %s46
      %p48 = scmp.eq.s32.totalorder %s22, 0
      %p49 = por %p47, %p48
      %s50 = ssub.s32 %s16, %s23
      %p51 = scmp.eq.s32.totalorder %s50, 0
      %s53 = sadd.s32 %s52, 1
      %s54 = scalar_select %p51, %s52, %s53
      %p57 = pneg %p51
      %p58 = scmp.eq.s32.totalorder %s16, 1
      %p59 = por %p57, %p58
      %p60 = scmp.ne.s32.totalorder %s52, %s55
      %p61 = scmp.eq.s32.totalorder %s16, 0
      %p62 = por %p60, %p61
      %p63 = scmp.ne.s32.totalorder %s52, %s55
      %p64 = scmp.eq.s32.totalorder %s21, 1
      %p65 = por %p63, %p64
      %p66 = scmp.ne.s32.totalorder %s55, %s56
      %p67 = scmp.eq.s32.totalorder %s21, 0
      %p68 = por %p66, %p67
      %p69 = scmp.ne.s32.totalorder %s55, %s56
      %p70 = scmp.eq.s32.totalorder %s22, 1
      %p71 = por %p69, %p70
      %p73 = scmp.ne.s32.totalorder %s56, %s72
      %p74 = scmp.eq.s32.totalorder %s22, 0
      %p75 = por %p73, %p74
      %s77 = sadd.s32 %s76, 1
      %p80 = scmp.eq.s32.totalorder %s16, 1
      %p81 = scmp.ne.s32.totalorder %s76, %s78
      %p82 = scmp.eq.s32.totalorder %s16, 0
      %p83 = por %p81, %p82
      %p84 = scmp.ne.s32.totalorder %s76, %s78
      %p85 = scmp.eq.s32.totalorder %s21, 1
      %p86 = por %p84, %p85
      %p87 = scmp.ne.s32.totalorder %s78, %s79
      %p88 = scmp.eq.s32.totalorder %s21, 0
      %p89 = por %p87, %p88
      %p90 = scmp.ne.s32.totalorder %s78, %s79
      %p91 = scmp.eq.s32.totalorder %s22, 1
      %p92 = por %p90, %p91
      %p94 = scmp.ne.s32.totalorder %s79, %s93
      %p95 = scmp.eq.s32.totalorder %s22, 0
      %p96 = por %p94, %p95
      %s98 = sadd.s32 %s97, 1
      %p101 = scmp.eq.s32.totalorder %s16, 1
      %p102 = scmp.ne.s32.totalorder %s97, %s99
      %p103 = scmp.eq.s32.totalorder %s16, 0
      %p104 = por %p102, %p103
      %p105 = scmp.ne.s32.totalorder %s97, %s99
      %p106 = scmp.eq.s32.totalorder %s21, 1
      %p107 = por %p105, %p106
      %p108 = scmp.ne.s32.totalorder %s99, %s100
      %p109 = scmp.eq.s32.totalorder %s21, 0
      %p110 = por %p108, %p109
      %p111 = scmp.ne.s32.totalorder %s99, %s100
      %p112 = scmp.eq.s32.totalorder %s22, 1
      %p113 = por %p111, %p112
      %p115 = scmp.ne.s32.totalorder %s100, %s114
      %p116 = scmp.eq.s32.totalorder %s22, 0
      %p117 = por %p115, %p116
      %s118 = ssub.s32 %s16, %s23
      %p119 = scmp.eq.s32.totalorder %s118, 0
      %s121 = sadd.s32 %s120, 1
      %s122 = scalar_select %p119, %s120, %s121
      %p125 = pneg %p119
      %p126 = scmp.eq.s32.totalorder %s16, 1
      %p127 = por %p125, %p126
      %p128 = scmp.ne.s32.totalorder %s120, %s123
      %p129 = scmp.eq.s32.totalorder %s16, 0
      %p130 = por %p128, %p129
      %p131 = scmp.ne.s32.totalorder %s120, %s123
      %p132 = scmp.eq.s32.totalorder %s21, 1
      %p133 = por %p131, %p132
      %p134 = scmp.ne.s32.totalorder %s123, %s124
      %p135 = scmp.eq.s32.totalorder %s21, 0
      %p136 = por %p134, %p135
      %p137 = scmp.ne.s32.totalorder %s123, %s124
      %p138 = scmp.eq.s32.totalorder %s22, 1
      %p139 = por %p137, %p138
      %p141 = scmp.ne.s32.totalorder %s124, %s140
      %p142 = scmp.eq.s32.totalorder %s22, 0
      %p143 = por %p141, %p142
      %s144 = ssub.s32 %s16, %s23
      %p145 = scmp.eq.s32.totalorder %s144, 0
      %s147 = sadd.s32 %s146, 1
      %s148 = scalar_select %p145, %s146, %s147
      %p151 = pneg %p145
      %p152 = scmp.eq.s32.totalorder %s16, 1
      %p153 = por %p151, %p152
      %p154 = scmp.ne.s32.totalorder %s146, %s149
      %p155 = scmp.eq.s32.totalorder %s16, 0
      %p156 = por %p154, %p155
      %p157 = scmp.ne.s32.totalorder %s146, %s149
      %p158 = scmp.eq.s32.totalorder %s21, 1
      %p159 = por %p157, %p158
      %p160 = scmp.ne.s32.totalorder %s149, %s150
      %p161 = scmp.eq.s32.totalorder %s21, 0
      %p162 = por %p160, %p161
      %p163 = scmp.ne.s32.totalorder %s149, %s150
      %p164 = scmp.eq.s32.totalorder %s22, 1
      %p165 = por %p163, %p164
      %p167 = scmp.ne.s32.totalorder %s150, %s166
      %p168 = scmp.eq.s32.totalorder %s22, 0
      %p169 = por %p167, %p168
      %p170 = scmp.le.s32.totalorder 1, %s16
      %p171 = scmp.lt.s32.totalorder %s16, 3
      %p172 = pnand %p170, %p171
      %p173 = pneg %p172
      // Predicated region
      $region9: #{tpu_custom_call.1} parent=5 // pred_check
        _
      $region10: #{tpu_custom_call.1} parent=5 // pred_check_branch
        %175 = sbr.rel (%p172) target = $region12
      $region11: #{tpu_custom_call.1} parent=5 // pred_region
        %s176 = ssub.s32 %s16, 1
        // Predicated region
        $region13: #{tpu_custom_call.1} parent=11 // pred_check
          %p177 = pneg %p89
        $region14: #{tpu_custom_call.1} parent=11 // pred_check_branch
          %179 = sbr.rel (%p177) target = $region16
        $region15: #{tpu_custom_call.1} parent=11 // pred_region
          %s181 = ssub.s32 2048, 2048
          %182 = vsyncadd [#allocation3], %s181
          %s183 = sshll.u32 [#allocation2], 4
          %s184 = int_to_ptr.vmem [resolvable:$true] %s183
          %189 = dma.hbm_to_vmem [thread:$0]  %s2, 2048, %s184, [#allocation3], 128, 128, 8
        $region16: #{tpu_custom_call.1} parent=11 // pred_fallthru
          _
        // Predicated region
        $region17: #{tpu_custom_call.1} parent=11 // pred_check
          %p190 = pneg %p110
        $region18: #{tpu_custom_call.1} parent=11 // pred_check_branch
          %192 = sbr.rel (%p190) target = $region20
        $region19: #{tpu_custom_call.1} parent=11 // pred_region
          _
        $region20: #{tpu_custom_call.1} parent=11 // pred_fallthru
          _
      $region12: #{tpu_custom_call.1} parent=5 // pred_fallthru
        _
      %p193 = scmp.lt.s32.totalorder %s16, 2
      // Predicated region
      $region21: #{tpu_custom_call.1} parent=5 // pred_check
        %p194 = pneg %p193
      $region22: #{tpu_custom_call.1} parent=5 // pred_check_branch
        %196 = sbr.rel (%p194) target = $region24
      $region23: #{tpu_custom_call.1} parent=5 // pred_region
        // Predicated region
        $region25: #{tpu_custom_call.1} parent=23 // pred_check
          %p197 = pneg %p36
        $region26: #{tpu_custom_call.1} parent=23 // pred_check_branch
          %199 = sbr.rel (%p197) target = $region28
        $region27: #{tpu_custom_call.1} parent=23 // pred_region
          %p200 = scmp.lt.s32.totalorder %s16, 1
          %s201 = scalar_select %p200, %s16, 1
          %s202 = smul.addr %s201, 8
          %s203 = scalar_lea.vmem %s0, %s202
        $region28: #{tpu_custom_call.1} parent=23 // pred_fallthru
          _
        // Predicated region
        $region29: #{tpu_custom_call.1} parent=23 // pred_check
          %p204 = pneg %p62
        $region30: #{tpu_custom_call.1} parent=23 // pred_check_branch
          %206 = sbr.rel (%p204) target = $region32
        $region31: #{tpu_custom_call.1} parent=23 // pred_region
          %p207 = scmp.lt.s32.totalorder %s16, 1
          %s208 = scalar_select %p207, %s16, 1
          %s209 = smul.addr %s208, 8
          %s210 = scalar_lea.vmem %s1, %s209
        $region32: #{tpu_custom_call.1} parent=23 // pred_fallthru
          _
      $region24: #{tpu_custom_call.1} parent=5 // pred_fallthru
        _
      %p211 = scmp.le.s32.totalorder 1, %s16
      %p212 = scmp.lt.s32.totalorder %s16, 3
      %p213 = pnand %p211, %p212
      %p214 = pneg %p213
      // Predicated region
      $region33: #{tpu_custom_call.1} parent=5 // pred_check
        _
      $region34: #{tpu_custom_call.1} parent=5 // pred_check_branch
        %216 = sbr.rel (%p213) target = $region36
      $region35: #{tpu_custom_call.1} parent=5 // pred_region
        %s217 = ssub.s32 %s16, 1
        // Predicated region
        $region37: #{tpu_custom_call.1} parent=35 // pred_check
          %p218 = pneg %p89
        $region38: #{tpu_custom_call.1} parent=35 // pred_check_branch
          %220 = sbr.rel (%p218) target = $region40
        $region39: #{tpu_custom_call.1} parent=35 // pred_region
          %221 = dma.done [#allocation3], 2048
        $region40: #{tpu_custom_call.1} parent=35 // pred_fallthru
          _
        %p222 = scmp.lt.s32.totalorder %s21, 1
        %s223 = scalar_select %p222, %s21, 1
        %s224 = smul.addr %s223, 8
        %s225 = scalar_lea.vmem %s0, %s224
        %p226 = pneg %p42
        %p227 = pneg %p39
        %p228 = scmp.lt.s32.totalorder %s21, 1
        %s229 = scalar_select %p228, %s21, 1
        %s230 = smul.addr %s229, 8
        %s231 = scalar_lea.vmem %s1, %s230
        %p232 = pneg %p68
        %p233 = pneg %p65
        %p234 = pneg %p89
        %p235 = pneg %p86
        %p236 = pneg %p110
        %p237 = pneg %p107
        %p238 = pneg %p136
        %p239 = pneg %p133
        %s240 = sand.u32 %s123, 1
        %s241 = scalar_lea.sflag [#allocation4], %s240
        %s242 = sand.u32 %s123, 1
        %s243 = smul.addr %s242, 8
        %s244 = scalar_lea.vmem [#allocation5], %s243
        %p245 = pneg %p162
        %p246 = pneg %p159
        %p247 = scmp.lt.s32.totalorder %s21, 1
        %s248 = scalar_select %p247, %s21, 1
        %s249 = scalar_lea.vmem %s5, %s248
        %p250 = scmp.lt.s32.totalorder %s21, 1
        %s251 = scalar_select %p250, %s21, 1
        %s252 = smul.addr %s251, 8
        %s253 = scalar_lea.vmem %s0, %s252
        %p254 = scmp.lt.s32.totalorder %s21, 1
        %s255 = scalar_select %p254, %s21, 1
        %s256 = smul.addr %s255, 8
        %s257 = scalar_lea.vmem %s1, %s256
        %p258 = scmp.lt.s32.totalorder %s21, 1
        %s259 = scalar_select %p258, %s21, 1
        %s260 = scalar_lea.vmem %s5, %s259
        %v261 = vld [vmem:[%s253] sm:$0xff]
        %v262 = vld [vmem:[#allocation2] sm:$0xff]
        %v263 = vld [vmem:[#allocation2 + $0x8] sm:$0xff]
        %v264 = vld [vmem:[#allocation2 + $0x10] sm:$0xff]
        %v265 = vld [vmem:[#allocation2 + $0x18] sm:$0xff]
        %v266 = vld [vmem:[#allocation2 + $0x20] sm:$0xff]
        %v267 = vld [vmem:[#allocation2 + $0x28] sm:$0xff]
        %v268 = vld [vmem:[#allocation2 + $0x30] sm:$0xff]
        %v269 = vld [vmem:[#allocation2 + $0x38] sm:$0xff]
        %v270 = vld [vmem:[#allocation2 + $0x40] sm:$0xff]
        %v271 = vld [vmem:[#allocation2 + $0x48] sm:$0xff]
        %v272 = vld [vmem:[#allocation2 + $0x50] sm:$0xff]
        %v273 = vld [vmem:[#allocation2 + $0x58] sm:$0xff]
        %v274 = vld [vmem:[#allocation2 + $0x60] sm:$0xff]
        %v275 = vld [vmem:[#allocation2 + $0x68] sm:$0xff]
        %v276 = vld [vmem:[#allocation2 + $0x70] sm:$0xff]
        %v277 = vld [vmem:[#allocation2 + $0x78] sm:$0xff]
        %v278 = vlaneseq
        %v279 = vand.u32 %v278, 127
        %280 = vset.pattern.permute.xlu0 0
        %281 = vperm.xlu0 %280, %v261
        %v282 = vpop.permute.xlu0 %281
        %vm283 = vcmp.eq.s32.totalorder %v279, %v282
        %v284 = vsel %vm283, 1, 0
        %v285 = vcvt.s32.f32 %v284
        %286 = vmatprep.subr.mxu0 0.0
        %v287 = vand.u32 %v262, 4294901760
        %288 = vmatpush1.msra.mxu0 %v287
        %289 = vmatprep.subr.mxu0 0.0
        %v290 = vand.u32 %v263, 4294901760
        %291 = vmatpush1.msra.mxu0 %v290
        %292 = vmatprep.subr.mxu0 0.0
        %v293 = vand.u32 %v264, 4294901760
        %294 = vmatpush1.msra.mxu0 %v293
        %295 = vmatprep.subr.mxu0 0.0
        %v296 = vand.u32 %v265, 4294901760
        %297 = vmatpush1.msra.mxu0 %v296
        %298 = vmatprep.subr.mxu0 0.0
        %v299 = vand.u32 %v266, 4294901760
        %300 = vmatpush1.msra.mxu0 %v299
        %301 = vmatprep.subr.mxu0 0.0
        %v302 = vand.u32 %v267, 4294901760
        %303 = vmatpush1.msra.mxu0 %v302
        %304 = vmatprep.subr.mxu0 0.0
        %v305 = vand.u32 %v268, 4294901760
        %306 = vmatpush1.msra.mxu0 %v305
        %307 = vmatprep.subr.mxu0 0.0
        %v308 = vand.u32 %v269, 4294901760
        %309 = vmatpush1.msra.mxu0 %v308
        %310 = vmatprep.subr.mxu0 0.0
        %v311 = vand.u32 %v270, 4294901760
        %312 = vmatpush1.msra.mxu0 %v311
        %313 = vmatprep.subr.mxu0 0.0
        %v314 = vand.u32 %v271, 4294901760
        %315 = vmatpush1.msra.mxu0 %v314
        %316 = vmatprep.subr.mxu0 0.0
        %v317 = vand.u32 %v272, 4294901760
        %318 = vmatpush1.msra.mxu0 %v317
        %319 = vmatprep.subr.mxu0 0.0
        %v320 = vand.u32 %v273, 4294901760
        %321 = vmatpush1.msra.mxu0 %v320
        %322 = vmatprep.subr.mxu0 0.0
        %v323 = vand.u32 %v274, 4294901760
        %324 = vmatpush1.msra.mxu0 %v323
        %325 = vmatprep.subr.mxu0 0.0
        %v326 = vand.u32 %v275, 4294901760
        %327 = vmatpush1.msra.mxu0 %v326
        %328 = vmatprep.subr.mxu0 0.0
        %v329 = vand.u32 %v276, 4294901760
        %330 = vmatpush1.msra.mxu0 %v329
        %331 = vmatprep.subr.mxu0 0.0
        %v332 = vand.u32 %v277, 4294901760
        %333 = vmatpush1.msra.mxu0 %v332
        %334 = vmatprep.subr.mxu0 0.0
        %335 = vmatpush1.msra.mxu0 0.0
        %336 = vmatprep.subr.mxu0 0.0
        %337 = vmatpush1.msra.mxu0 0.0
        %338 = vmatprep.subr.mxu0 0.0
        %339 = vmatpush1.msra.mxu0 0.0
        %340 = vmatprep.subr.mxu0 0.0
        %341 = vmatpush1.msra.mxu0 0.0
        %342 = vmatprep.subr.mxu0 0.0
        %343 = vmatpush1.msra.mxu0 0.0
        %344 = vmatprep.subr.mxu0 0.0
        %345 = vmatpush1.msra.mxu0 0.0
        %346 = vmatprep.subr.mxu0 0.0
        %347 = vmatpush1.msra.mxu0 0.0
        %348 = vmatprep.subr.mxu0 0.0
        %349 = vmatpush1.msra.mxu0 0.0
        %350 = vmatprep.subr.mxu0 0.0
        %351 = vmatpush1.msra.mxu0 0.0
        %352 = vmatprep.subr.mxu0 0.0
        %353 = vmatpush1.msra.mxu0 0.0
        %354 = vmatprep.subr.mxu0 0.0
        %355 = vmatpush1.msra.mxu0 0.0
        %356 = vmatprep.subr.mxu0 0.0
        %357 = vmatpush1.msra.mxu0 0.0
        %358 = vmatprep.subr.mxu0 0.0
        %359 = vmatpush1.msra.mxu0 0.0
        %360 = vmatprep.subr.mxu0 0.0
        %361 = vmatpush1.msra.mxu0 0.0
        %362 = vmatprep.subr.mxu0 0.0
        %363 = vmatpush1.msra.mxu0 0.0
        %364 = vmatprep.subr.mxu0 0.0
        %365 = vmatpush1.msra.mxu0 0.0
        %366 = vmatprep.mubr.f32.mxu0 0.0
        %v367 = vand.u32 %v285, 4294901760
        %v368 = vsub.f32 %v285, %v367
        %v369 = vand.u32 %v368, 4294901760
        %v370 = vsub.f32 %v368, %v369
        %v371 = vand.u32 %v370, 4294901760
        %372 = vmatmul.mubr.f32.gmra.mrb[0].mxu0 %v371
        %v373 = vpop.f32.mrb[0].mxu0
        %v374 = vadd.f32 0.0, %v373
        %v375 = vpop.f32.mrb[0].mxu0
        %376 = vdwg.mxu0
        %377 = vmatprep.subr.mxu0 0.0
        %v378 = vand.u32 %v262, 4294901760
        %v379 = vsub.f32 %v262, %v378
        %v380 = vand.u32 %v379, 4294901760
        %v381 = vsub.f32 %v379, %v380
        %v382 = vand.u32 %v381, 4294901760
        %383 = vmatpush1.msra.mxu0 %v382
        %384 = vmatprep.subr.mxu0 0.0
        %v385 = vand.u32 %v263, 4294901760
        %v386 = vsub.f32 %v263, %v385
        %v387 = vand.u32 %v386, 4294901760
        %v388 = vsub.f32 %v386, %v387
        %v389 = vand.u32 %v388, 4294901760
        %390 = vmatpush1.msra.mxu0 %v389
        %391 = vmatprep.subr.mxu0 0.0
        %v392 = vand.u32 %v264, 4294901760
        %v393 = vsub.f32 %v264, %v392
        %v394 = vand.u32 %v393, 4294901760
        %v395 = vsub.f32 %v393, %v394
        %v396 = vand.u32 %v395, 4294901760
        %397 = vmatpush1.msra.mxu0 %v396
        %398 = vmatprep.subr.mxu0 0.0
        %v399 = vand.u32 %v265, 4294901760
        %v400 = vsub.f32 %v265, %v399
        %v401 = vand.u32 %v400, 4294901760
        %v402 = vsub.f32 %v400, %v401
        %v403 = vand.u32 %v402, 4294901760
        %404 = vmatpush1.msra.mxu0 %v403
        %405 = vmatprep.subr.mxu0 0.0
        %v406 = vand.u32 %v266, 4294901760
        %v407 = vsub.f32 %v266, %v406
        %v408 = vand.u32 %v407, 4294901760
        %v409 = vsub.f32 %v407, %v408
        %v410 = vand.u32 %v409, 4294901760
        %411 = vmatpush1.msra.mxu0 %v410
        %412 = vmatprep.subr.mxu0 0.0
        %v413 = vand.u32 %v267, 4294901760
        %v414 = vsub.f32 %v267, %v413
        %v415 = vand.u32 %v414, 4294901760
        %v416 = vsub.f32 %v414, %v415
        %v417 = vand.u32 %v416, 4294901760
        %418 = vmatpush1.msra.mxu0 %v417
        %419 = vmatprep.subr.mxu0 0.0
        %v420 = vand.u32 %v268, 4294901760
        %v421 = vsub.f32 %v268, %v420
        %v422 = vand.u32 %v421, 4294901760
        %v423 = vsub.f32 %v421, %v422
        %v424 = vand.u32 %v423, 4294901760
        %425 = vmatpush1.msra.mxu0 %v424
        %426 = vmatprep.subr.mxu0 0.0
        %v427 = vand.u32 %v269, 4294901760
        %v428 = vsub.f32 %v269, %v427
        %v429 = vand.u32 %v428, 4294901760
        %v430 = vsub.f32 %v428, %v429
        %v431 = vand.u32 %v430, 4294901760
        %432 = vmatpush1.msra.mxu0 %v431
        %433 = vmatprep.subr.mxu0 0.0
        %v434 = vand.u32 %v270, 4294901760
        %v435 = vsub.f32 %v270, %v434
        %v436 = vand.u32 %v435, 4294901760
        %v437 = vsub.f32 %v435, %v436
        %v438 = vand.u32 %v437, 4294901760
        %439 = vmatpush1.msra.mxu0 %v438
        %440 = vmatprep.subr.mxu0 0.0
        %v441 = vand.u32 %v271, 4294901760
        %v442 = vsub.f32 %v271, %v441
        %v443 = vand.u32 %v442, 4294901760
        %v444 = vsub.f32 %v442, %v443
        %v445 = vand.u32 %v444, 4294901760
        %446 = vmatpush1.msra.mxu0 %v445
        %447 = vmatprep.subr.mxu0 0.0
        %v448 = vand.u32 %v272, 4294901760
        %v449 = vsub.f32 %v272, %v448
        %v450 = vand.u32 %v449, 4294901760
        %v451 = vsub.f32 %v449, %v450
        %v452 = vand.u32 %v451, 4294901760
        %453 = vmatpush1.msra.mxu0 %v452
        %454 = vmatprep.subr.mxu0 0.0
        %v455 = vand.u32 %v273, 4294901760
        %v456 = vsub.f32 %v273, %v455
        %v457 = vand.u32 %v456, 4294901760
        %v458 = vsub.f32 %v456, %v457
        %v459 = vand.u32 %v458, 4294901760
        %460 = vmatpush1.msra.mxu0 %v459
        %461 = vmatprep.subr.mxu0 0.0
        %v462 = vand.u32 %v274, 4294901760
        %v463 = vsub.f32 %v274, %v462
        %v464 = vand.u32 %v463, 4294901760
        %v465 = vsub.f32 %v463, %v464
        %v466 = vand.u32 %v465, 4294901760
        %467 = vmatpush1.msra.mxu0 %v466
        %468 = vmatprep.subr.mxu0 0.0
        %v469 = vand.u32 %v275, 4294901760
        %v470 = vsub.f32 %v275, %v469
        %v471 = vand.u32 %v470, 4294901760
        %v472 = vsub.f32 %v470, %v471
        %v473 = vand.u32 %v472, 4294901760
        %474 = vmatpush1.msra.mxu0 %v473
        %475 = vmatprep.subr.mxu0 0.0
        %v476 = vand.u32 %v276, 4294901760
        %v477 = vsub.f32 %v276, %v476
        %v478 = vand.u32 %v477, 4294901760
        %v479 = vsub.f32 %v477, %v478
        %v480 = vand.u32 %v479, 4294901760
        %481 = vmatpush1.msra.mxu0 %v480
        %482 = vmatprep.subr.mxu0 0.0
        %v483 = vand.u32 %v277, 4294901760
        %v484 = vsub.f32 %v277, %v483
        %v485 = vand.u32 %v484, 4294901760
        %v486 = vsub.f32 %v484, %v485
        %v487 = vand.u32 %v486, 4294901760
        %488 = vmatpush1.msra.mxu0 %v487
        %489 = vmatprep.subr.mxu0 0.0
        %490 = vmatpush1.msra.mxu0 0.0
        %491 = vmatprep.subr.mxu0 0.0
        %492 = vmatpush1.msra.mxu0 0.0
        %493 = vmatprep.subr.mxu0 0.0
        %494 = vmatpush1.msra.mxu0 0.0
        %495 = vmatprep.subr.mxu0 0.0
        %496 = vmatpush1.msra.mxu0 0.0
        %497 = vmatprep.subr.mxu0 0.0
        %498 = vmatpush1.msra.mxu0 0.0
        %499 = vmatprep.subr.mxu0 0.0
        %500 = vmatpush1.msra.mxu0 0.0
        %501 = vmatprep.subr.mxu0 0.0
        %502 = vmatpush1.msra.mxu0 0.0
        %503 = vmatprep.subr.mxu0 0.0
        %504 = vmatpush1.msra.mxu0 0.0
        %505 = vmatprep.subr.mxu0 0.0
        %506 = vmatpush1.msra.mxu0 0.0
        %507 = vmatprep.subr.mxu0 0.0
        %508 = vmatpush1.msra.mxu0 0.0
        %509 = vmatprep.subr.mxu0 0.0
        %510 = vmatpush1.msra.mxu0 0.0
        %511 = vmatprep.subr.mxu0 0.0
        %512 = vmatpush1.msra.mxu0 0.0
        %513 = vmatprep.subr.mxu0 0.0
        %514 = vmatpush1.msra.mxu0 0.0
        %515 = vmatprep.subr.mxu0 0.0
        %516 = vmatpush1.msra.mxu0 0.0
        %517 = vmatprep.subr.mxu0 0.0
        %518 = vmatpush1.msra.mxu0 0.0
        %519 = vmatprep.subr.mxu0 0.0
        %520 = vmatpush1.msra.mxu0 0.0
        %521 = vmatprep.mubr.f32.mxu0 0.0
        %v522 = vand.u32 %v285, 4294901760
        %523 = vmatmul.mubr.f32.gmra.mrb[0].mxu0 %v522
        %v524 = vpop.f32.mrb[0].mxu0
        %v525 = vadd.f32 %v374, %v524
        %v526 = vpop.f32.mrb[0].mxu0
        %527 = vdwg.mxu0
        %528 = vmatprep.subr.mxu0 0.0
        %v529 = vand.u32 %v262, 4294901760
        %v530 = vsub.f32 %v262, %v529
        %531 = vmatpush1.msra.mxu0 %v530
        %532 = vmatprep.subr.mxu0 0.0
        %v533 = vand.u32 %v263, 4294901760
        %v534 = vsub.f32 %v263, %v533
        %535 = vmatpush1.msra.mxu0 %v534
        %536 = vmatprep.subr.mxu0 0.0
        %v537 = vand.u32 %v264, 4294901760
        %v538 = vsub.f32 %v264, %v537
        %539 = vmatpush1.msra.mxu0 %v538
        %540 = vmatprep.subr.mxu0 0.0
        %v541 = vand.u32 %v265, 4294901760
        %v542 = vsub.f32 %v265, %v541
        %543 = vmatpush1.msra.mxu0 %v542
        %544 = vmatprep.subr.mxu0 0.0
        %v545 = vand.u32 %v266, 4294901760
        %v546 = vsub.f32 %v266, %v545
        %547 = vmatpush1.msra.mxu0 %v546
        %548 = vmatprep.subr.mxu0 0.0
        %v549 = vand.u32 %v267, 4294901760
        %v550 = vsub.f32 %v267, %v549
        %551 = vmatpush1.msra.mxu0 %v550
        %552 = vmatprep.subr.mxu0 0.0
        %v553 = vand.u32 %v268, 4294901760
        %v554 = vsub.f32 %v268, %v553
        %555 = vmatpush1.msra.mxu0 %v554
        %556 = vmatprep.subr.mxu0 0.0
        %v557 = vand.u32 %v269, 4294901760
        %v558 = vsub.f32 %v269, %v557
        %559 = vmatpush1.msra.mxu0 %v558
        %560 = vmatprep.subr.mxu0 0.0
        %v561 = vand.u32 %v270, 4294901760
        %v562 = vsub.f32 %v270, %v561
        %563 = vmatpush1.msra.mxu0 %v562
        %564 = vmatprep.subr.mxu0 0.0
        %v565 = vand.u32 %v271, 4294901760
        %v566 = vsub.f32 %v271, %v565
        %567 = vmatpush1.msra.mxu0 %v566
        %568 = vmatprep.subr.mxu0 0.0
        %v569 = vand.u32 %v272, 4294901760
        %v570 = vsub.f32 %v272, %v569
        %571 = vmatpush1.msra.mxu0 %v570
        %572 = vmatprep.subr.mxu0 0.0
        %v573 = vand.u32 %v273, 4294901760
        %v574 = vsub.f32 %v273, %v573
        %575 = vmatpush1.msra.mxu0 %v574
        %576 = vmatprep.subr.mxu0 0.0
        %v577 = vand.u32 %v274, 4294901760
        %v578 = vsub.f32 %v274, %v577
        %579 = vmatpush1.msra.mxu0 %v578
        %580 = vmatprep.subr.mxu0 0.0
        %v581 = vand.u32 %v275, 4294901760
        %v582 = vsub.f32 %v275, %v581
        %583 = vmatpush1.msra.mxu0 %v582
        %584 = vmatprep.subr.mxu0 0.0
        %v585 = vand.u32 %v276, 4294901760
        %v586 = vsub.f32 %v276, %v585
        %587 = vmatpush1.msra.mxu0 %v586
        %588 = vmatprep.subr.mxu0 0.0
        %v589 = vand.u32 %v277, 4294901760
        %v590 = vsub.f32 %v277, %v589
        %591 = vmatpush1.msra.mxu0 %v590
        %592 = vmatprep.subr.mxu0 0.0
        %593 = vmatpush1.msra.mxu0 0.0
        %594 = vmatprep.subr.mxu0 0.0
        %595 = vmatpush1.msra.mxu0 0.0
        %596 = vmatprep.subr.mxu0 0.0
        %597 = vmatpush1.msra.mxu0 0.0
        %598 = vmatprep.subr.mxu0 0.0
        %599 = vmatpush1.msra.mxu0 0.0
        %600 = vmatprep.subr.mxu0 0.0
        %601 = vmatpush1.msra.mxu0 0.0
        %602 = vmatprep.subr.mxu0 0.0
        %603 = vmatpush1.msra.mxu0 0.0
        %604 = vmatprep.subr.mxu0 0.0
        %605 = vmatpush1.msra.mxu0 0.0
        %606 = vmatprep.subr.mxu0 0.0
        %607 = vmatpush1.msra.mxu0 0.0
        %608 = vmatprep.subr.mxu0 0.0
        %609 = vmatpush1.msra.mxu0 0.0
        %610 = vmatprep.subr.mxu0 0.0
        %611 = vmatpush1.msra.mxu0 0.0
        %612 = vmatprep.subr.mxu0 0.0
        %613 = vmatpush1.msra.mxu0 0.0
        %614 = vmatprep.subr.mxu0 0.0
        %615 = vmatpush1.msra.mxu0 0.0
        %616 = vmatprep.subr.mxu0 0.0
        %617 = vmatpush1.msra.mxu0 0.0
        %618 = vmatprep.subr.mxu0 0.0
        %619 = vmatpush1.msra.mxu0 0.0
        %620 = vmatprep.subr.mxu0 0.0
        %621 = vmatpush1.msra.mxu0 0.0
        %622 = vmatprep.subr.mxu0 0.0
        %623 = vmatpush1.msra.mxu0 0.0
        %624 = vmatprep.mubr.f32.mxu0 0.0
        %v625 = vand.u32 %v285, 4294901760
        %v626 = vsub.f32 %v285, %v625
        %627 = vmatmul.mubr.f32.gmra.mrb[0].mxu0 %v626
        %v628 = vpop.f32.mrb[0].mxu0
        %v629 = vadd.f32 %v525, %v628
        %v630 = vpop.f32.mrb[0].mxu0
        %631 = vdwg.mxu0
        %632 = vmatprep.subr.mxu0 0.0
        %v633 = vand.u32 %v262, 4294901760
        %634 = vmatpush1.msra.mxu0 %v633
        %635 = vmatprep.subr.mxu0 0.0
        %v636 = vand.u32 %v263, 4294901760
        %637 = vmatpush1.msra.mxu0 %v636
        %638 = vmatprep.subr.mxu0 0.0
        %v639 = vand.u32 %v264, 4294901760
        %640 = vmatpush1.msra.mxu0 %v639
        %641 = vmatprep.subr.mxu0 0.0
        %v642 = vand.u32 %v265, 4294901760
        %643 = vmatpush1.msra.mxu0 %v642
        %644 = vmatprep.subr.mxu0 0.0
        %v645 = vand.u32 %v266, 4294901760
        %646 = vmatpush1.msra.mxu0 %v645
        %647 = vmatprep.subr.mxu0 0.0
        %v648 = vand.u32 %v267, 4294901760
        %649 = vmatpush1.msra.mxu0 %v648
        %650 = vmatprep.subr.mxu0 0.0
        %v651 = vand.u32 %v268, 4294901760
        %652 = vmatpush1.msra.mxu0 %v651
        %653 = vmatprep.subr.mxu0 0.0
        %v654 = vand.u32 %v269, 4294901760
        %655 = vmatpush1.msra.mxu0 %v654
        %656 = vmatprep.subr.mxu0 0.0
        %v657 = vand.u32 %v270, 4294901760
        %658 = vmatpush1.msra.mxu0 %v657
        %659 = vmatprep.subr.mxu0 0.0
        %v660 = vand.u32 %v271, 4294901760
        %661 = vmatpush1.msra.mxu0 %v660
        %662 = vmatprep.subr.mxu0 0.0
        %v663 = vand.u32 %v272, 4294901760
        %664 = vmatpush1.msra.mxu0 %v663
        %665 = vmatprep.subr.mxu0 0.0
        %v666 = vand.u32 %v273, 4294901760
        %667 = vmatpush1.msra.mxu0 %v666
        %668 = vmatprep.subr.mxu0 0.0
        %v669 = vand.u32 %v274, 4294901760
        %670 = vmatpush1.msra.mxu0 %v669
        %671 = vmatprep.subr.mxu0 0.0
        %v672 = vand.u32 %v275, 4294901760
        %673 = vmatpush1.msra.mxu0 %v672
        %674 = vmatprep.subr.mxu0 0.0
        %v675 = vand.u32 %v276, 4294901760
        %676 = vmatpush1.msra.mxu0 %v675
        %677 = vmatprep.subr.mxu0 0.0
        %v678 = vand.u32 %v277, 4294901760
        %679 = vmatpush1.msra.mxu0 %v678
        %680 = vmatprep.subr.mxu0 0.0
        %681 = vmatpush1.msra.mxu0 0.0
        %682 = vmatprep.subr.mxu0 0.0
        %683 = vmatpush1.msra.mxu0 0.0
        %684 = vmatprep.subr.mxu0 0.0
        %685 = vmatpush1.msra.mxu0 0.0
        %686 = vmatprep.subr.mxu0 0.0
        %687 = vmatpush1.msra.mxu0 0.0
        %688 = vmatprep.subr.mxu0 0.0
        %689 = vmatpush1.msra.mxu0 0.0
        %690 = vmatprep.subr.mxu0 0.0
        %691 = vmatpush1.msra.mxu0 0.0
        %692 = vmatprep.subr.mxu0 0.0
        %693 = vmatpush1.msra.mxu0 0.0
        %694 = vmatprep.subr.mxu0 0.0
        %695 = vmatpush1.msra.mxu0 0.0
        %696 = vmatprep.subr.mxu0 0.0
        %697 = vmatpush1.msra.mxu0 0.0
        %698 = vmatprep.subr.mxu0 0.0
        %699 = vmatpush1.msra.mxu0 0.0
        %700 = vmatprep.subr.mxu0 0.0
        %701 = vmatpush1.msra.mxu0 0.0
        %702 = vmatprep.subr.mxu0 0.0
        %703 = vmatpush1.msra.mxu0 0.0
        %704 = vmatprep.subr.mxu0 0.0
        %705 = vmatpush1.msra.mxu0 0.0
        %706 = vmatprep.subr.mxu0 0.0
        %707 = vmatpush1.msra.mxu0 0.0
        %708 = vmatprep.subr.mxu0 0.0
        %709 = vmatpush1.msra.mxu0 0.0
        %710 = vmatprep.subr.mxu0 0.0
        %711 = vmatpush1.msra.mxu0 0.0
        %712 = vmatprep.mubr.f32.mxu0 0.0
        %v713 = vand.u32 %v285, 4294901760
        %v714 = vsub.f32 %v285, %v713
        %v715 = vand.u32 %v714, 4294901760
        %716 = vmatmul.mubr.f32.gmra.mrb[0].mxu0 %v715
        %v717 = vpop.f32.mrb[0].mxu0
        %v718 = vadd.f32 %v629, %v717
        %v719 = vpop.f32.mrb[0].mxu0
        %720 = vdwg.mxu0
        %721 = vmatprep.subr.mxu0 0.0
        %v722 = vand.u32 %v262, 4294901760
        %v723 = vsub.f32 %v262, %v722
        %v724 = vand.u32 %v723, 4294901760
        %725 = vmatpush1.msra.mxu0 %v724
        %726 = vmatprep.subr.mxu0 0.0
        %v727 = vand.u32 %v263, 4294901760
        %v728 = vsub.f32 %v263, %v727
        %v729 = vand.u32 %v728, 4294901760
        %730 = vmatpush1.msra.mxu0 %v729
        %731 = vmatprep.subr.mxu0 0.0
        %v732 = vand.u32 %v264, 4294901760
        %v733 = vsub.f32 %v264, %v732
        %v734 = vand.u32 %v733, 4294901760
        %735 = vmatpush1.msra.mxu0 %v734
        %736 = vmatprep.subr.mxu0 0.0
        %v737 = vand.u32 %v265, 4294901760
        %v738 = vsub.f32 %v265, %v737
        %v739 = vand.u32 %v738, 4294901760
        %740 = vmatpush1.msra.mxu0 %v739
        %741 = vmatprep.subr.mxu0 0.0
        %v742 = vand.u32 %v266, 4294901760
        %v743 = vsub.f32 %v266, %v742
        %v744 = vand.u32 %v743, 4294901760
        %745 = vmatpush1.msra.mxu0 %v744
        %746 = vmatprep.subr.mxu0 0.0
        %v747 = vand.u32 %v267, 4294901760
        %v748 = vsub.f32 %v267, %v747
        %v749 = vand.u32 %v748, 4294901760
        %750 = vmatpush1.msra.mxu0 %v749
        %751 = vmatprep.subr.mxu0 0.0
        %v752 = vand.u32 %v268, 4294901760
        %v753 = vsub.f32 %v268, %v752
        %v754 = vand.u32 %v753, 4294901760
        %755 = vmatpush1.msra.mxu0 %v754
        %756 = vmatprep.subr.mxu0 0.0
        %v757 = vand.u32 %v269, 4294901760
        %v758 = vsub.f32 %v269, %v757
        %v759 = vand.u32 %v758, 4294901760
        %760 = vmatpush1.msra.mxu0 %v759
        %761 = vmatprep.subr.mxu0 0.0
        %v762 = vand.u32 %v270, 4294901760
        %v763 = vsub.f32 %v270, %v762
        %v764 = vand.u32 %v763, 4294901760
        %765 = vmatpush1.msra.mxu0 %v764
        %766 = vmatprep.subr.mxu0 0.0
        %v767 = vand.u32 %v271, 4294901760
        %v768 = vsub.f32 %v271, %v767
        %v769 = vand.u32 %v768, 4294901760
        %770 = vmatpush1.msra.mxu0 %v769
        %771 = vmatprep.subr.mxu0 0.0
        %v772 = vand.u32 %v272, 4294901760
        %v773 = vsub.f32 %v272, %v772
        %v774 = vand.u32 %v773, 4294901760
        %775 = vmatpush1.msra.mxu0 %v774
        %776 = vmatprep.subr.mxu0 0.0
        %v777 = vand.u32 %v273, 4294901760
        %v778 = vsub.f32 %v273, %v777
        %v779 = vand.u32 %v778, 4294901760
        %780 = vmatpush1.msra.mxu0 %v779
        %781 = vmatprep.subr.mxu0 0.0
        %v782 = vand.u32 %v274, 4294901760
        %v783 = vsub.f32 %v274, %v782
        %v784 = vand.u32 %v783, 4294901760
        %785 = vmatpush1.msra.mxu0 %v784
        %786 = vmatprep.subr.mxu0 0.0
        %v787 = vand.u32 %v275, 4294901760
        %v788 = vsub.f32 %v275, %v787
        %v789 = vand.u32 %v788, 4294901760
        %790 = vmatpush1.msra.mxu0 %v789
        %791 = vmatprep.subr.mxu0 0.0
        %v792 = vand.u32 %v276, 4294901760
        %v793 = vsub.f32 %v276, %v792
        %v794 = vand.u32 %v793, 4294901760
        %795 = vmatpush1.msra.mxu0 %v794
        %796 = vmatprep.subr.mxu0 0.0
        %v797 = vand.u32 %v277, 4294901760
        %v798 = vsub.f32 %v277, %v797
        %v799 = vand.u32 %v798, 4294901760
        %800 = vmatpush1.msra.mxu0 %v799
        %801 = vmatprep.subr.mxu0 0.0
        %802 = vmatpush1.msra.mxu0 0.0
        %803 = vmatprep.subr.mxu0 0.0
        %804 = vmatpush1.msra.mxu0 0.0
        %805 = vmatprep.subr.mxu0 0.0
        %806 = vmatpush1.msra.mxu0 0.0
        %807 = vmatprep.subr.mxu0 0.0
        %808 = vmatpush1.msra.mxu0 0.0
        %809 = vmatprep.subr.mxu0 0.0
        %810 = vmatpush1.msra.mxu0 0.0
        %811 = vmatprep.subr.mxu0 0.0
        %812 = vmatpush1.msra.mxu0 0.0
        %813 = vmatprep.subr.mxu0 0.0
        %814 = vmatpush1.msra.mxu0 0.0
        %815 = vmatprep.subr.mxu0 0.0
        %816 = vmatpush1.msra.mxu0 0.0
        %817 = vmatprep.subr.mxu0 0.0
        %818 = vmatpush1.msra.mxu0 0.0
        %819 = vmatprep.subr.mxu0 0.0
        %820 = vmatpush1.msra.mxu0 0.0
        %821 = vmatprep.subr.mxu0 0.0
        %822 = vmatpush1.msra.mxu0 0.0
        %823 = vmatprep.subr.mxu0 0.0
        %824 = vmatpush1.msra.mxu0 0.0
        %825 = vmatprep.subr.mxu0 0.0
        %826 = vmatpush1.msra.mxu0 0.0
        %827 = vmatprep.subr.mxu0 0.0
        %828 = vmatpush1.msra.mxu0 0.0
        %829 = vmatprep.subr.mxu0 0.0
        %830 = vmatpush1.msra.mxu0 0.0
        %831 = vmatprep.subr.mxu0 0.0
        %832 = vmatpush1.msra.mxu0 0.0
        %833 = vmatprep.mubr.f32.mxu0 0.0
        %v834 = vand.u32 %v285, 4294901760
        %835 = vmatmul.mubr.f32.gmra.mrb[0].mxu0 %v834
        %v836 = vpop.f32.mrb[0].mxu0
        %v837 = vadd.f32 %v718, %v836
        %v838 = vpop.f32.mrb[0].mxu0
        %839 = vdwg.mxu0
        %840 = vmatprep.subr.mxu0 0.0
        %v841 = vand.u32 %v262, 4294901760
        %842 = vmatpush1.msra.mxu0 %v841
        %843 = vmatprep.subr.mxu0 0.0
        %v844 = vand.u32 %v263, 4294901760
        %845 = vmatpush1.msra.mxu0 %v844
        %846 = vmatprep.subr.mxu0 0.0
        %v847 = vand.u32 %v264, 4294901760
        %848 = vmatpush1.msra.mxu0 %v847
        %849 = vmatprep.subr.mxu0 0.0
        %v850 = vand.u32 %v265, 4294901760
        %851 = vmatpush1.msra.mxu0 %v850
        %852 = vmatprep.subr.mxu0 0.0
        %v853 = vand.u32 %v266, 4294901760
        %854 = vmatpush1.msra.mxu0 %v853
        %855 = vmatprep.subr.mxu0 0.0
        %v856 = vand.u32 %v267, 4294901760
        %857 = vmatpush1.msra.mxu0 %v856
        %858 = vmatprep.subr.mxu0 0.0
        %v859 = vand.u32 %v268, 4294901760
        %860 = vmatpush1.msra.mxu0 %v859
        %861 = vmatprep.subr.mxu0 0.0
        %v862 = vand.u32 %v269, 4294901760
        %863 = vmatpush1.msra.mxu0 %v862
        %864 = vmatprep.subr.mxu0 0.0
        %v865 = vand.u32 %v270, 4294901760
        %866 = vmatpush1.msra.mxu0 %v865
        %867 = vmatprep.subr.mxu0 0.0
        %v868 = vand.u32 %v271, 4294901760
        %869 = vmatpush1.msra.mxu0 %v868
        %870 = vmatprep.subr.mxu0 0.0
        %v871 = vand.u32 %v272, 4294901760
        %872 = vmatpush1.msra.mxu0 %v871
        %873 = vmatprep.subr.mxu0 0.0
        %v874 = vand.u32 %v273, 4294901760
        %875 = vmatpush1.msra.mxu0 %v874
        %876 = vmatprep.subr.mxu0 0.0
        %v877 = vand.u32 %v274, 4294901760
        %878 = vmatpush1.msra.mxu0 %v877
        %879 = vmatprep.subr.mxu0 0.0
        %v880 = vand.u32 %v275, 4294901760
        %881 = vmatpush1.msra.mxu0 %v880
        %882 = vmatprep.subr.mxu0 0.0
        %v883 = vand.u32 %v276, 4294901760
        %884 = vmatpush1.msra.mxu0 %v883
        %885 = vmatprep.subr.mxu0 0.0
        %v886 = vand.u32 %v277, 4294901760
        %887 = vmatpush1.msra.mxu0 %v886
        %888 = vmatprep.subr.mxu0 0.0
        %889 = vmatpush1.msra.mxu0 0.0
        %890 = vmatprep.subr.mxu0 0.0
        %891 = vmatpush1.msra.mxu0 0.0
        %892 = vmatprep.subr.mxu0 0.0
        %893 = vmatpush1.msra.mxu0 0.0
        %894 = vmatprep.subr.mxu0 0.0
        %895 = vmatpush1.msra.mxu0 0.0
        %896 = vmatprep.subr.mxu0 0.0
        %897 = vmatpush1.msra.mxu0 0.0
        %898 = vmatprep.subr.mxu0 0.0
        %899 = vmatpush1.msra.mxu0 0.0
        %900 = vmatprep.subr.mxu0 0.0
        %901 = vmatpush1.msra.mxu0 0.0
        %902 = vmatprep.subr.mxu0 0.0
        %903 = vmatpush1.msra.mxu0 0.0
        %904 = vmatprep.subr.mxu0 0.0
        %905 = vmatpush1.msra.mxu0 0.0
        %906 = vmatprep.subr.mxu0 0.0
        %907 = vmatpush1.msra.mxu0 0.0
        %908 = vmatprep.subr.mxu0 0.0
        %909 = vmatpush1.msra.mxu0 0.0
        %910 = vmatprep.subr.mxu0 0.0
        %911 = vmatpush1.msra.mxu0 0.0
        %912 = vmatprep.subr.mxu0 0.0
        %913 = vmatpush1.msra.mxu0 0.0
        %914 = vmatprep.subr.mxu0 0.0
        %915 = vmatpush1.msra.mxu0 0.0
        %916 = vmatprep.subr.mxu0 0.0
        %917 = vmatpush1.msra.mxu0 0.0
        %918 = vmatprep.subr.mxu0 0.0
        %919 = vmatpush1.msra.mxu0 0.0
        %920 = vmatprep.mubr.f32.mxu0 0.0
        %v921 = vand.u32 %v285, 4294901760
        %922 = vmatmul.mubr.f32.gmra.mrb[0].mxu0 %v921
        %v923 = vpop.f32.mrb[0].mxu0
        %v924 = vadd.f32 %v837, %v923
        %v925 = vpop.f32.mrb[0].mxu0
        %926 = vdwg.mxu0
        %927 = vst [vmem:[%s244] sm:$0xff] %v924
        %v928 = vld [vmem:[%s3] sm:$0x1]
        %v930 = vlaneseq
        %v931 = vshrl.u32 %v930, 7
        %v932 = vsub.s32 0, %v931
        %v933 = vrot.slane %v928, %v932
        %v935 = vsel %vm283, %v933, 0.0
        %936 = vadd.xlane.f32.xlu0 %v935
        %v937 = vpop.xlane.xlu0 %936
        %v938 = vld [vmem:[%s257] sm:$0xff]
        %939 = vset.pattern.permute.xlu0 0
        %940 = vperm.xlu0 %939, %v938
        %v941 = vpop.permute.xlu0 %940
        %vm942 = vcmp.eq.s32.totalorder %v279, %v941
        %v943 = vsel %vm942, %v924, 0.0
        %944 = vadd.xlane.f32.xlu0 %v943
        %v945 = vpop.xlane.xlu0 %944
        %v946 = vlaneseq
        %v947 = vshrl.u32 %v946, 7
        %s948 = smul.u32 %s21, 8
        %v949 = vstv %s948
        %v950 = vadd.s32 %v949, %v947
        %vm951 = vcmp.lt.s32.totalorder %v950, 16
        %v952 = vsub.f32 %v937, %v945
        %v953 = vsel %vm951, %v952, 0.0
        %v954 = vrot.slane %v953, 4
        %v955 = vadd.f32 %v953, %v954
        %v956 = vrot.slane %v955, 2
        %v957 = vadd.f32 %v955, %v956
        %v958 = vrot.slane %v957, 1
        %v959 = vadd.f32 %v957, %v958
        %vm960 = vcmask 0
        %961 = vst.msk [vmem:[%s260] sm:$0x1] %vm960, %v959
        %s962 = sand.u32 %s123, 1
        %s963 = scalar_lea.sflag [#allocation4], %s962
        %s964 = sand.u32 %s123, 1
        %s965 = smul.addr %s964, 8
        %s966 = scalar_lea.vmem [#allocation5], %s965
        %p967 = scmp.lt.s32.totalorder %s21, 1
        %s968 = scalar_select %p967, %s21, 1
        %s969 = scalar_lea.vmem %s5, %s968
        // Predicated region
        $region41: #{tpu_custom_call.1} parent=35 // pred_check
          %p970 = pneg %p133
        $region42: #{tpu_custom_call.1} parent=35 // pred_check_branch
          %972 = sbr.rel (%p970) target = $region44
        $region43: #{tpu_custom_call.1} parent=35 // pred_region
          %s974 = ssub.s32 128, 128
          %975 = vsyncadd %s963, %s974
          %s976 = smul.addr %s21, 128
          %s977 = scalar_lea.hbm %s4, %s976
          %s979 = sshll.u32 %s966, 4
          %s980 = int_to_ptr.vmem [resolvable:$true] %s979
          %982 = dma.vmem_to_hbm [thread:$0]  %s980, 128, %s977, %s963
        $region44: #{tpu_custom_call.1} parent=35 // pred_fallthru
          _
        // Predicated region
        $region45: #{tpu_custom_call.1} parent=35 // pred_check
          %p983 = pneg %p159
        $region46: #{tpu_custom_call.1} parent=35 // pred_check_branch
          %985 = sbr.rel (%p983) target = $region48
        $region47: #{tpu_custom_call.1} parent=35 // pred_region
          _
        $region48: #{tpu_custom_call.1} parent=35 // pred_fallthru
          _
      $region36: #{tpu_custom_call.1} parent=5 // pred_fallthru
        _
      %p986 = scmp.le.s32.totalorder 2, %s16
      // Predicated region
      $region49: #{tpu_custom_call.1} parent=5 // pred_check
        %p987 = pneg %p986
      $region50: #{tpu_custom_call.1} parent=5 // pred_check_branch
        %989 = sbr.rel (%p987) target = $region52
      $region51: #{tpu_custom_call.1} parent=5 // pred_region
        %s990 = ssub.s32 %s16, 2
        // Predicated region
        $region53: #{tpu_custom_call.1} parent=51 // pred_check
          %p991 = pneg %p139
        $region54: #{tpu_custom_call.1} parent=51 // pred_check_branch
          %993 = sbr.rel (%p991) target = $region56
        $region55: #{tpu_custom_call.1} parent=51 // pred_region
          %s994 = sand.u32 %s124, 1
          %s995 = scalar_lea.sflag [#allocation4], %s994
          %s996 = sand.u32 %s124, 1
          %s997 = smul.addr %s996, 8
          %s998 = scalar_lea.vmem [#allocation5], %s997
          %999 = dma.done %s995, 128
        $region56: #{tpu_custom_call.1} parent=51 // pred_fallthru
          _
        // Predicated region
        $region57: #{tpu_custom_call.1} parent=51 // pred_check
          %p1000 = pneg %p165
        $region58: #{tpu_custom_call.1} parent=51 // pred_check_branch
          %1002 = sbr.rel (%p1000) target = $region60
        $region59: #{tpu_custom_call.1} parent=51 // pred_region
          %p1003 = scmp.lt.s32.totalorder %s22, 1
          %s1004 = scalar_select %p1003, %s22, 1
          %s1005 = scalar_lea.vmem %s5, %s1004
        $region60: #{tpu_custom_call.1} parent=51 // pred_fallthru
          _
      $region52: #{tpu_custom_call.1} parent=5 // pred_fallthru
        _
    $region6: #{tpu_custom_call.1} parent=1 // loop_footer
      %s20 = sadd.s32 1, %s16
    $region7: #{tpu_custom_call.1} parent=1 // loop_footer_branch
      %15 = sbr.rel target = $region3
    $region8: #{tpu_custom_call.1} parent=1 // loop_exit
      _
    %1006 = vsyncpa [#allocation3], 1
    %s1007 = scalar_lea.sflag [#allocation3], 1
    %1008 = vsyncpa %s1007, 1
    %1009 = vsyncpa [#allocation4], 1
    %s1010 = scalar_lea.sflag [#allocation4], 1
    %1011 = vsyncpa %s1010, 1

</llo_original>
